<compile_context>
chip_gen: v6e
topology: v6e:2x2x1
jax: 0.10.0
libtpu: 0.0.40
codegen_flags: <defaults>
</compile_context>

<pallas_src>
import jax
import jax.numpy as jnp
from jax.experimental import pallas as pl
from jax.experimental.pallas import tpu as pltpu

_SMOOTH = 1e-05
_LANE = 128
_MAX_TILE = 32 * 1024   # spatial elements per channel per grid step (~12 MiB VMEM total)


def _round_up(x, m):
    return (x + m - 1) // m * m


def _make_kernel(n_classes, tile, apply_softmax):
    C = n_classes

    def kernel(x_ref, t_ref, w_ref, o_ref, acc_a, acc_b, acc_s):
        b = pl.program_id(0)
        s = pl.program_id(1)
        nb = pl.num_programs(0)
        ns = pl.num_programs(1)

        @pl.when(jnp.logical_and(b == 0, s == 0))
        def _init():
            acc_a[...] = jnp.zeros_like(acc_a)
            acc_b[...] = jnp.zeros_like(acc_b)
            acc_s[...] = jnp.zeros_like(acc_s)

        x = x_ref[0].astype(jnp.float32)          # (C, TILE) logits for this tile
        labels = t_ref[0]                         # (1, TILE) int32 labels

        if apply_softmax:                         # static flag: no cost when False
            x = jax.nn.softmax(x, axis=0)         # all C channels are in the block

        # target_combined: (target > 0), identical for every repeated channel.
        tc = (labels > 0).astype(jnp.float32)     # (1, TILE)

        # _one_hot_encoder for all classes at once (int compares, then cast).
        class_ids = jax.lax.broadcasted_iota(jnp.int32, (C, tile), 0)
        one_hot = (labels == class_ids).astype(jnp.float32)   # (C, TILE) in {0,1}
        # (the reference's `<=0 -> 0`, `>0 -> 1` clamps are no-ops on a 0/1 tensor)

        # re_hot_target: sequential in-place masking of the reference -- after
        # both steps every entry is 0 (the module's bug, reproduced faithfully).
        re_hot = jnp.where(one_hot <= 0.0, 1.0, one_hot)
        re_hot = jnp.where(re_hot > 0.0, 0.0, re_hot)

        # relabel: `<1 -> 0` then `>=1 -> 1`  ==  (re_hot*tc >= 1) ? 1 : 0
        relabel = jnp.where(re_hot * tc >= 1.0, 1.0, 0.0)
        sinp = x * relabel                        # sinputs[:, i] for all i at once

        # In-lane (VPU-only) partial sums; no per-tile cross-lane reductions.
        acc_a[...] += sinp * tc                   # per-class sum(sinp * tc) partials
        acc_b[...] += sinp * sinp                 # per-class sum(sinp^2)    partials
        acc_s[...] += tc                          # class-invariant sum(tc)  partials

        @pl.when(jnp.logical_and(b == nb - 1, s == ns - 1))
        def _finalize():
            a_sum = jnp.sum(acc_a[...], axis=1, keepdims=True)   # (C, 1)
            b_sum = jnp.sum(acc_b[...], axis=1, keepdims=True)   # (C, 1)
            s_sum = jnp.sum(acc_s[...])                          # scalar == y_sum

            # score = sinp + tc for each class:
            intersect = a_sum + s_sum                            # sum(score * tc)
            z_sum = b_sum + 2.0 * a_sum + s_sum                  # sum(score * score)
            dice = 1.0 - (2.0 * intersect + _SMOOTH) / (z_sum + s_sum + _SMOOTH)
            loss = jnp.sum(dice * w_ref[...]) / float(C)
            o_ref[...] = jnp.broadcast_to(loss, o_ref.shape)

    return kernel


def dice_loss_samtopo(inputs, target, n_classes, weight=None, softmax=False):
    """Pallas implementation of DiceLosssamtopo.forward.

    inputs: (B, C, H, W) float logits, target: (B, H, W) integer class labels.
    """
    B, C, H, W = inputs.shape
    assert C == n_classes
    # The reference hardcodes `.repeat(1, 9, 1, 1)`, so shapes only match for 9.
    assert n_classes == 9, "reference module hardcodes 9 repeated channels"
    assert target.shape == (B, H, W)

    if weight is None:
        weight = [1.0] * n_classes
    w = jnp.asarray(weight, dtype=jnp.float32).reshape(n_classes, 1)

    hw = H * W
    n_tiles = -(-hw // _MAX_TILE)                    # cdiv
    tile = _round_up(-(-hw // n_tiles), _LANE)       # lane-aligned tile size
    hw_pad = tile * n_tiles

    x = inputs.reshape(B, C, hw)
    t = target.astype(jnp.int32).reshape(B, 1, hw)
    if hw_pad != hw:
        # Pad labels with class 0 -> tc == 0 there -> exactly zero contribution.
        x = jnp.pad(x, ((0, 0), (0, 0), (0, hw_pad - hw)))
        t = jnp.pad(t, ((0, 0), (0, 0), (0, hw_pad - hw)))

    kernel = _make_kernel(n_classes, tile, softmax)

    # TODO(synk): on v7x the batch axis could be marked "parallel" by emitting
    # per-batch partial sums and finishing the dice formula in JAX; the global
    # accumulator below keeps the whole reduction on one TensorCore.
    out = pl.pallas_call(
        kernel,
        out_shape=jax.ShapeDtypeStruct((1, _LANE), jnp.float32),
        grid_spec=pltpu.PrefetchScalarGridSpec(
            num_scalar_prefetch=0,
            grid=(B, n_tiles),
            in_specs=[
                pl.BlockSpec((1, C, tile), lambda b, s: (b, 0, s)),        # logits slab
                pl.BlockSpec((1, 1, tile), lambda b, s: (b, 0, s)),        # label slab
                pl.BlockSpec((n_classes, 1), lambda b, s: (0, 0)),         # class weights
            ],
            out_specs=pl.BlockSpec((1, _LANE), lambda b, s: (0, 0)),
            scratch_shapes=[
                pltpu.VMEM((n_classes, tile), jnp.float32),   # acc: sum(sinp * tc)
                pltpu.VMEM((n_classes, tile), jnp.float32),   # acc: sum(sinp^2)
                pltpu.VMEM((1, tile), jnp.float32),           # acc: sum(tc)
            ],
        ),
        compiler_params=pltpu.CompilerParams(
            dimension_semantics=("arbitrary", "arbitrary"),
            vmem_limit_bytes=32 * 1024 * 1024,
        ),
    )(x, t, w)
    return out[0, 0]


def _reference_jax(inputs, target, n_classes, weight=None, softmax=False):
    """Plain-JAX transcription of the PyTorch forward, for verification."""
    x = inputs.astype(jnp.float32)
    if softmax:
        x = jax.nn.softmax(x, axis=1)
    tgt = target.astype(jnp.float32)
    if weight is None:
        weight = [1] * n_classes
    smooth = 1e-05
    tc = (tgt > 0).astype(jnp.float32)
    loss = 0.0
    for i in range(n_classes):
        oh = (tgt == i).astype(jnp.float32)
        oh = jnp.where(oh <= 0, 0.0, oh)
        oh = jnp.where(oh > 0, 1.0, oh)
        re = jnp.where(oh <= 0, 1.0, oh)
        re = jnp.where(re > 0, 0.0, re)
        rl = re * tc
        rl = jnp.where(rl < 1, 0.0, rl)
        rl = jnp.where(rl >= 1, 1.0, rl)
        score = x[:, i] * rl + tc
        inter = jnp.sum(score * tc)
        y = jnp.sum(tc * tc)
        z = jnp.sum(score * score)
        dice = 1.0 - (2 * inter + smooth) / (z + y + smooth)
        loss = loss + dice * weight[i]
    return loss / n_classes


if __name__ == "__main__":
    n_classes = 9
    B, H, W = 2, 16, 16

    key = jax.random.PRNGKey(0)
    k1, k2 = jax.random.split(key)
    inputs = jax.random.normal(k1, (B, n_classes, H, W), dtype=jnp.float32)
    target = jax.random.randint(k2, (B, H, W), 0, n_classes, dtype=jnp.int32)

    loss = dice_loss_samtopo(inputs, target, n_classes, softmax=False)
    loss = jax.block_until_ready(loss)

    ref = _reference_jax(inputs, target, n_classes, softmax=False)
    assert abs(float(loss) - float(ref)) < 1e-5, (float(loss), float(ref))

    print("KERNEL_OK")
</pallas_src>

<mosaic_0001>
module attributes {stable_mosaic.version = 11 : i64} {
  func.func @kernel(%arg0: i32, %arg1: i32, %arg2: memref<1x9x256xf32, #tpu.memory_space<vmem>>, %arg3: memref<1x1x256xi32, #tpu.memory_space<vmem>>, %arg4: memref<9x1xf32, #tpu.memory_space<vmem>>, %arg5: memref<1x128xf32, #tpu.memory_space<vmem>>, %arg6: memref<9x256xf32, #tpu.memory_space<vmem>>, %arg7: memref<9x256xf32, #tpu.memory_space<vmem>>, %arg8: memref<1x256xf32, #tpu.memory_space<vmem>>) attributes {dimension_semantics = [#tpu.dimension_semantics<arbitrary>, #tpu.dimension_semantics<arbitrary>], iteration_bounds = array<i64: 2, 1>, scalar_prefetch = 0 : i64, scratch_operands = 3 : i64, tpu.core_type = #tpu.core_type<tc>, window_params = [{transform_indices = @transform_0, window_bounds = array<i64: 1, 9, 256>}, {transform_indices = @transform_1, window_bounds = array<i64: 1, 1, 256>}, {pipeline_mode = #tpu.pipeline_mode<synchronous>, transform_indices = @transform_2, window_bounds = array<i64: 9, 1>}, {pipeline_mode = #tpu.pipeline_mode<synchronous>, transform_indices = @transform_3, window_bounds = array<i64: 1, 128>}]} {
    %c0_i32 = arith.constant 0 : i32
    %0 = arith.cmpi eq, %arg0, %c0_i32 : i32
    %c0_i32_0 = arith.constant 0 : i32
    %1 = arith.cmpi eq, %arg1, %c0_i32_0 : i32
    %2 = arith.andi %0, %1 : i1
    %3 = arith.extui %2 : i1 to i32
    %c0_i32_1 = arith.constant 0 : i32
    %4 = arith.cmpi ne, %3, %c0_i32_1 : i32
    scf.if %4 {
      %cst_28 = arith.constant 0.000000e+00 : f32
      %51 = vector.broadcast %cst_28 : f32 to vector<9x256xf32>
      %c0_29 = arith.constant 0 : index
      %c0_30 = arith.constant 0 : index
      %52 = vector.load %arg6[%c0_29, %c0_30] : memref<9x256xf32, #tpu.memory_space<vmem>>, vector<9x256xf32>
      tpu.vector_store %arg6[%c0_29, %c0_30], %51 {strides = array<i32>} : memref<9x256xf32, #tpu.memory_space<vmem>>, vector<9x256xf32>,
      %cst_31 = arith.constant 0.000000e+00 : f32
      %53 = vector.broadcast %cst_31 : f32 to vector<9x256xf32>
      %c0_32 = arith.constant 0 : index
      %c0_33 = arith.constant 0 : index
      %54 = vector.load %arg7[%c0_32, %c0_33] : memref<9x256xf32, #tpu.memory_space<vmem>>, vector<9x256xf32>
      tpu.vector_store %arg7[%c0_32, %c0_33], %53 {strides = array<i32>} : memref<9x256xf32, #tpu.memory_space<vmem>>, vector<9x256xf32>,
      %cst_34 = arith.constant 0.000000e+00 : f32
      %55 = vector.broadcast %cst_34 : f32 to vector<1x256xf32>
      %c0_35 = arith.constant 0 : index
      %c0_36 = arith.constant 0 : index
      %56 = vector.load %arg8[%c0_35, %c0_36] : memref<1x256xf32, #tpu.memory_space<vmem>>, vector<1x256xf32>
      tpu.vector_store %arg8[%c0_35, %c0_36], %55 {strides = array<i32>} : memref<1x256xf32, #tpu.memory_space<vmem>>, vector<1x256xf32>,
    } else {
    }
    %c0 = arith.constant 0 : index
    %c0_2 = arith.constant 0 : index
    %c0_3 = arith.constant 0 : index
    %5 = vector.load %arg2[%c0, %c0_2, %c0_3] : memref<1x9x256xf32, #tpu.memory_space<vmem>>, vector<1x9x256xf32>
    %6 = vector.shape_cast %5 : vector<1x9x256xf32> to vector<9x256xf32>
    %c0_4 = arith.constant 0 : index
    %c0_5 = arith.constant 0 : index
    %c0_6 = arith.constant 0 : index
    %7 = vector.load %arg3[%c0_4, %c0_5, %c0_6] : memref<1x1x256xi32, #tpu.memory_space<vmem>>, vector<1x1x256xi32>
    %8 = vector.shape_cast %7 : vector<1x1x256xi32> to vector<1x256xi32>
    %c0_i32_7 = arith.constant 0 : i32
    %9 = vector.broadcast %c0_i32_7 : i32 to vector<1x256xi32>
    %10 = arith.cmpi sgt, %8, %9 : vector<1x256xi32>
    %11 = arith.extui %10 : vector<1x256xi1> to vector<1x256xi32>
    %12 = arith.sitofp %11 : vector<1x256xi32> to vector<1x256xf32>
    %13 = tpu.iota {dimensions = array<i32: 0>} : vector<9x256xi32>
    %14 = vector.broadcast %8 : vector<1x256xi32> to vector<9x256xi32>
    %15 = arith.cmpi eq, %14, %13 : vector<9x256xi32>
    %16 = arith.extui %15 : vector<9x256xi1> to vector<9x256xi32>
    %17 = arith.sitofp %16 : vector<9x256xi32> to vector<9x256xf32>
    %cst = arith.constant 0.000000e+00 : f32
    %18 = vector.broadcast %cst : f32 to vector<9x256xf32>
    %19 = arith.cmpf ole, %17, %18 : vector<9x256xf32>
    %cst_8 = arith.constant 1.000000e+00 : f32
    %20 = vector.broadcast %cst_8 : f32 to vector<9x256xf32>
    %21 = arith.select %19, %20, %17 : vector<9x256xi1>, vector<9x256xf32>
    %cst_9 = arith.constant 0.000000e+00 : f32
    %22 = vector.broadcast %cst_9 : f32 to vector<9x256xf32>
    %23 = arith.cmpf ogt, %21, %22 : vector<9x256xf32>
    %cst_10 = arith.constant 0.000000e+00 : f32
    %24 = vector.broadcast %cst_10 : f32 to vector<9x256xf32>
    %25 = arith.select %23, %24, %21 : vector<9x256xi1>, vector<9x256xf32>
    %26 = vector.broadcast %12 : vector<1x256xf32> to vector<9x256xf32>
    %27 = arith.mulf %25, %26 : vector<9x256xf32>
    %cst_11 = arith.constant 1.000000e+00 : f32
    %28 = vector.broadcast %cst_11 : f32 to vector<9x256xf32>
    %29 = arith.cmpf oge, %27, %28 : vector<9x256xf32>
    %cst_12 = arith.constant 1.000000e+00 : f32
    %cst_13 = arith.constant 0.000000e+00 : f32
    %30 = vector.broadcast %cst_12 : f32 to vector<9x256xf32>
    %31 = vector.broadcast %cst_13 : f32 to vector<9x256xf32>
    %32 = arith.select %29, %30, %31 : vector<9x256xi1>, vector<9x256xf32>
    %33 = arith.mulf %6, %32 : vector<9x256xf32>
    %c0_14 = arith.constant 0 : index
    %c0_15 = arith.constant 0 : index
    %34 = vector.load %arg6[%c0_14, %c0_15] : memref<9x256xf32, #tpu.memory_space<vmem>>, vector<9x256xf32>
    %35 = vector.broadcast %12 : vector<1x256xf32> to vector<9x256xf32>
    %36 = arith.mulf %33, %35 : vector<9x256xf32>
    %37 = arith.addf %34, %36 : vector<9x256xf32>
    %c0_16 = arith.constant 0 : index
    %c0_17 = arith.constant 0 : index
    %38 = vector.load %arg6[%c0_16, %c0_17] : memref<9x256xf32, #tpu.memory_space<vmem>>, vector<9x256xf32>
    tpu.vector_store %arg6[%c0_16, %c0_17], %37 {strides = array<i32>} : memref<9x256xf32, #tpu.memory_space<vmem>>, vector<9x256xf32>,
    %c0_18 = arith.constant 0 : index
    %c0_19 = arith.constant 0 : index
    %39 = vector.load %arg7[%c0_18, %c0_19] : memref<9x256xf32, #tpu.memory_space<vmem>>, vector<9x256xf32>
    %40 = arith.mulf %33, %33 : vector<9x256xf32>
    %41 = arith.addf %39, %40 : vector<9x256xf32>
    %c0_20 = arith.constant 0 : index
    %c0_21 = arith.constant 0 : index
    %42 = vector.load %arg7[%c0_20, %c0_21] : memref<9x256xf32, #tpu.memory_space<vmem>>, vector<9x256xf32>
    tpu.vector_store %arg7[%c0_20, %c0_21], %41 {strides = array<i32>} : memref<9x256xf32, #tpu.memory_space<vmem>>, vector<9x256xf32>,
    %c0_22 = arith.constant 0 : index
    %c0_23 = arith.constant 0 : index
    %43 = vector.load %arg8[%c0_22, %c0_23] : memref<1x256xf32, #tpu.memory_space<vmem>>, vector<1x256xf32>
    %44 = arith.addf %43, %12 : vector<1x256xf32>
    %c0_24 = arith.constant 0 : index
    %c0_25 = arith.constant 0 : index
    %45 = vector.load %arg8[%c0_24, %c0_25] : memref<1x256xf32, #tpu.memory_space<vmem>>, vector<1x256xf32>
    tpu.vector_store %arg8[%c0_24, %c0_25], %44 {strides = array<i32>} : memref<1x256xf32, #tpu.memory_space<vmem>>, vector<1x256xf32>,
    %c1_i32 = arith.constant 1 : i32
    %46 = arith.cmpi eq, %arg0, %c1_i32 : i32
    %c0_i32_26 = arith.constant 0 : i32
    %47 = arith.cmpi eq, %arg1, %c0_i32_26 : i32
    %48 = arith.andi %46, %47 : i1
    %49 = arith.extui %48 : i1 to i32
    %c0_i32_27 = arith.constant 0 : i32
    %50 = arith.cmpi ne, %49, %c0_i32_27 : i32
    scf.if %50 {
      %c0_28 = arith.constant 0 : index
      %c0_29 = arith.constant 0 : index
      %51 = vector.load %arg6[%c0_28, %c0_29] : memref<9x256xf32, #tpu.memory_space<vmem>>, vector<9x256xf32>
      %cst_30 = arith.constant dense<0.000000e+00> : vector<9xf32>
      %52 = vector.multi_reduction <add>, %51, %cst_30 [1] : vector<9x256xf32> to vector<9xf32>
      %53 = vector.shape_cast %52 : vector<9xf32> to vector<9x1xf32>
      %c0_31 = arith.constant 0 : index
      %c0_32 = arith.constant 0 : index
      %54 = vector.load %arg7[%c0_31, %c0_32] : memref<9x256xf32, #tpu.memory_space<vmem>>, vector<9x256xf32>
      %cst_33 = arith.constant dense<0.000000e+00> : vector<9xf32>
      %55 = vector.multi_reduction <add>, %54, %cst_33 [1] : vector<9x256xf32> to vector<9xf32>
      %56 = vector.shape_cast %55 : vector<9xf32> to vector<9x1xf32>
      %c0_34 = arith.constant 0 : index
      %c0_35 = arith.constant 0 : index
      %57 = vector.load %arg8[%c0_34, %c0_35] : memref<1x256xf32, #tpu.memory_space<vmem>>, vector<1x256xf32>
      %58 = vector.shape_cast %57 : vector<1x256xf32> to vector<1x1x256xf32>
      %cst_36 = arith.constant dense<0.000000e+00> : vector<1xf32>
      %59 = vector.multi_reduction <add>, %58, %cst_36 [1, 2] : vector<1x1x256xf32> to vector<1xf32>
      %60 = vector.shape_cast %59 : vector<1xf32> to vector<1x1x1xf32>
      %61 = vector.extract %60[0, 0, 0] : f32 from vector<1x1x1xf32>
      %62 = vector.broadcast %61 : f32 to vector<9x1xf32>
      %63 = arith.addf %53, %62 : vector<9x1xf32>
      %cst_37 = arith.constant 2.000000e+00 : f32
      %64 = vector.broadcast %cst_37 : f32 to vector<9x1xf32>
      %65 = arith.mulf %64, %53 : vector<9x1xf32>
      %66 = arith.addf %56, %65 : vector<9x1xf32>
      %67 = vector.broadcast %61 : f32 to vector<9x1xf32>
      %68 = arith.addf %66, %67 : vector<9x1xf32>
      %cst_38 = arith.constant 2.000000e+00 : f32
      %69 = vector.broadcast %cst_38 : f32 to vector<9x1xf32>
      %70 = arith.mulf %69, %63 : vector<9x1xf32>
      %cst_39 = arith.constant 9.99999974E-6 : f32
      %71 = vector.broadcast %cst_39 : f32 to vector<9x1xf32>
      %72 = arith.addf %70, %71 : vector<9x1xf32>
      %73 = vector.broadcast %61 : f32 to vector<9x1xf32>
      %74 = arith.addf %68, %73 : vector<9x1xf32>
      %cst_40 = arith.constant 9.99999974E-6 : f32
      %75 = vector.broadcast %cst_40 : f32 to vector<9x1xf32>
      %76 = arith.addf %74, %75 : vector<9x1xf32>
      %77 = arith.divf %72, %76 : vector<9x1xf32>
      %cst_41 = arith.constant 1.000000e+00 : f32
      %78 = vector.broadcast %cst_41 : f32 to vector<9x1xf32>
      %79 = arith.subf %78, %77 : vector<9x1xf32>
      %c0_42 = arith.constant 0 : index
      %c0_43 = arith.constant 0 : index
      %80 = vector.load %arg4[%c0_42, %c0_43] : memref<9x1xf32, #tpu.memory_space<vmem>>, vector<9x1xf32>
      %81 = arith.mulf %79, %80 : vector<9x1xf32>
      %82 = vector.shape_cast %81 : vector<9x1xf32> to vector<1x9x1xf32>
      %cst_44 = arith.constant dense<0.000000e+00> : vector<1xf32>
      %83 = vector.multi_reduction <add>, %82, %cst_44 [1, 2] : vector<1x9x1xf32> to vector<1xf32>
      %84 = vector.shape_cast %83 : vector<1xf32> to vector<1x1x1xf32>
      %85 = vector.extract %84[0, 0, 0] : f32 from vector<1x1x1xf32>
      %cst_45 = arith.constant 9.000000e+00 : f32
      %86 = arith.divf %85, %cst_45 : f32
      %87 = vector.broadcast %86 : f32 to vector<1x128xf32>
      %c0_46 = arith.constant 0 : index
      %c0_47 = arith.constant 0 : index
      %88 = vector.load %arg5[%c0_46, %c0_47] : memref<1x128xf32, #tpu.memory_space<vmem>>, vector<1x128xf32>
      tpu.vector_store %arg5[%c0_46, %c0_47], %87 {strides = array<i32>} : memref<1x128xf32, #tpu.memory_space<vmem>>, vector<1x128xf32>,
    } else {
    }
    return
  }
  func.func @transform_0(%arg0: i32, %arg1: i32) -> (i32, i32, i32) {
    %c0_i32 = arith.constant 0 : i32
    %c0_i32_0 = arith.constant 0 : i32
    return %arg0, %c0_i32, %arg1 : i32, i32, i32
  }
  func.func @transform_1(%arg0: i32, %arg1: i32) -> (i32, i32, i32) {
    %c0_i32 = arith.constant 0 : i32
    %c0_i32_0 = arith.constant 0 : i32
    return %arg0, %c0_i32, %arg1 : i32, i32, i32
  }
  func.func @transform_2(%arg0: i32, %arg1: i32) -> (i32, i32) {
    %c0_i32 = arith.constant 0 : i32
    %c0_i32_0 = arith.constant 0 : i32
    %c0_i32_1 = arith.constant 0 : i32
    return %c0_i32, %c0_i32_0 : i32, i32
  }
  func.func @transform_3(%arg0: i32, %arg1: i32) -> (i32, i32) {
    %c0_i32 = arith.constant 0 : i32
    %c0_i32_0 = arith.constant 0 : i32
    %c0_i32_1 = arith.constant 0 : i32
    return %c0_i32, %c0_i32_0 : i32, i32
  }
}

</mosaic_0001>

<llo_original>
// kernel: tpu_custom_call.1
$region0: #{tpu_custom_call.1}
  #allocation0 [shape = 'u32[]', space=smem, size = 0x4, offset = 0x4, fixed_abs, tag = 'smem constant byte address 0x4 - core index']
  #allocation1 [shape = 'u32[144,128]{1,0:T(1,128)}', space=vmem, size = 0x12000, scoped, tag = 'internal scratch']
  #allocation2 [shape = 'f32[9,256]{1,0:T(8,128)}', space=vmem, size = 0x4000, scoped, tag = 'scratch operand']
  #allocation3 [shape = 'f32[9,256]{1,0:T(8,128)}', space=vmem, size = 0x4000, scoped, tag = 'scratch operand']
  #allocation4 [shape = 'f32[1,256]{1,0:T(1,128)}', space=vmem, size = 0x400, scoped, tag = 'scratch operand']
  %s0 = inlined_call_operand.vmem [shape: f32[2,9,256], index: 0, kind: input, shape index: {}]
  %s1 = inlined_call_operand.vmem [shape: s32[2,1,256], index: 1, kind: input, shape index: {}]
  %s2 = inlined_call_operand.vmem [shape: f32[9,1], index: 2, kind: input, shape index: {}]
  %s3 = inlined_call_operand.hbm [shape: f32[1,128], index: 3, kind: output, shape index: {}]
  %s4 = sld [smem:[#allocation0]]
  $region53: #{tpu_custom_call.1} parent=0
    _
  %s6 = ssub.s32 1, %s4
  %s7 = scalar_select 0, %s6, %s4
  $region1: #{tpu_custom_call.1} parent=0
    #allocation5 [shape = 'u8[512]{0}', space=vmem, size = 0x400, scoped, tag = 'output window, operand 0, single buffered']
    #allocation6 [shape = 's32[2]{0}', space=sflag, size = 0x8, scoped, tag = 'scoped memory for tpu_custom_call.1']
    %8 = vsyncpa [#allocation6], 0
    loop: start=0, step=1, limit=4
    $region2: #{tpu_custom_call.1} parent=1 // loop_pre_header
      _
    $region3: #{tpu_custom_call.1} parent=1 // loop_header
      %s10 = sphi 0, %s14
      %p11 = scmp.ge.s32.totalorder %s10, 4
      %s17 = sphi 0, %s29
      %s18 = sphi 0, %s25
      %s19 = sphi 0, %s17
      %s20 = sphi 0, %s18
      %s21 = sphi 0, %s19
      %s22 = sphi 0, %s20
      %s34 = sphi 0, %s36
      %s37 = sphi 0, %s34
      %s38 = sphi 0, %s37
      %s54 = sphi 0, %s38
      %s62 = sphi 0, %s64
      %s65 = sphi 0, %s62
      %s66 = sphi 0, %s65
      %s82 = sphi 0, %s66
      %s86 = sphi 0, %s86
      %s88 = sphi 0, %s86
      %s89 = sphi 0, %s88
      %s103 = sphi 0, %s89
      %s107 = sphi 0, %s107
      %s109 = sphi 0, %s107
      %s110 = sphi 0, %s109
      %s124 = sphi 0, %s110
    $region4: #{tpu_custom_call.1} parent=1 // loop_header_branch
      %13 = sbr.rel (%p11) target = $region8
    $region5: #{tpu_custom_call.1} parent=1 // loop_body
      %s15 = ssub.s32 %s10, 1
      %s16 = ssub.s32 %s10, 2
      %s23 = sadd.s32 1, %s18
      %p24 = scmp.ge.s32.totalorder %s23, 1
      %s25 = scalar_select %p24, 0, %s23
      %s26 = sadd.s32 1, %s17
      %s27 = scalar_select %p24, %s26, %s17
      %p28 = scmp.ge.s32.totalorder %s27, 2
      %s29 = scalar_select %p28, 0, %s27
      %s30 = ssub.s32 %s17, %s29
      %s31 = ssub.s32 %s18, %s25
      %s32 = sor.u32 %s30, %s31
      %p33 = scmp.eq.s32.totalorder %s32, 0
      %s35 = sadd.s32 %s34, 1
      %s36 = scalar_select %p33, %s34, %s35
      %p39 = pneg %p33
      %p40 = scmp.eq.s32.totalorder %s10, 1
      %p41 = por %p39, %p40
      %p42 = scmp.ne.s32.totalorder %s34, %s37
      %p43 = scmp.eq.s32.totalorder %s10, 0
      %p44 = por %p42, %p43
      %p45 = scmp.ne.s32.totalorder %s34, %s37
      %p46 = scmp.eq.s32.totalorder %s15, 1
      %p47 = por %p45, %p46
      %p48 = scmp.ne.s32.totalorder %s37, %s38
      %p49 = scmp.eq.s32.totalorder %s15, 0
      %p50 = por %p48, %p49
      %p51 = scmp.ne.s32.totalorder %s37, %s38
      %p52 = scmp.eq.s32.totalorder %s16, 1
      %p53 = por %p51, %p52
      %p55 = scmp.ne.s32.totalorder %s38, %s54
      %p56 = scmp.eq.s32.totalorder %s16, 0
      %p57 = por %p55, %p56
      %s58 = ssub.s32 %s17, %s29
      %s59 = ssub.s32 %s18, %s25
      %s60 = sor.u32 %s58, %s59
      %p61 = scmp.eq.s32.totalorder %s60, 0
      %s63 = sadd.s32 %s62, 1
      %s64 = scalar_select %p61, %s62, %s63
      %p67 = pneg %p61
      %p68 = scmp.eq.s32.totalorder %s10, 1
      %p69 = por %p67, %p68
      %p70 = scmp.ne.s32.totalorder %s62, %s65
      %p71 = scmp.eq.s32.totalorder %s10, 0
      %p72 = por %p70, %p71
      %p73 = scmp.ne.s32.totalorder %s62, %s65
      %p74 = scmp.eq.s32.totalorder %s15, 1
      %p75 = por %p73, %p74
      %p76 = scmp.ne.s32.totalorder %s65, %s66
      %p77 = scmp.eq.s32.totalorder %s15, 0
      %p78 = por %p76, %p77
      %p79 = scmp.ne.s32.totalorder %s65, %s66
      %p80 = scmp.eq.s32.totalorder %s16, 1
      %p81 = por %p79, %p80
      %p83 = scmp.ne.s32.totalorder %s66, %s82
      %p84 = scmp.eq.s32.totalorder %s16, 0
      %p85 = por %p83, %p84
      %s87 = sadd.s32 %s86, 1
      %p90 = scmp.eq.s32.totalorder %s10, 1
      %p91 = scmp.ne.s32.totalorder %s86, %s88
      %p92 = scmp.eq.s32.totalorder %s10, 0
      %p93 = por %p91, %p92
      %p94 = scmp.ne.s32.totalorder %s86, %s88
      %p95 = scmp.eq.s32.totalorder %s15, 1
      %p96 = por %p94, %p95
      %p97 = scmp.ne.s32.totalorder %s88, %s89
      %p98 = scmp.eq.s32.totalorder %s15, 0
      %p99 = por %p97, %p98
      %p100 = scmp.ne.s32.totalorder %s88, %s89
      %p101 = scmp.eq.s32.totalorder %s16, 1
      %p102 = por %p100, %p101
      %p104 = scmp.ne.s32.totalorder %s89, %s103
      %p105 = scmp.eq.s32.totalorder %s16, 0
      %p106 = por %p104, %p105
      %s108 = sadd.s32 %s107, 1
      %p111 = scmp.eq.s32.totalorder %s10, 1
      %p112 = scmp.ne.s32.totalorder %s107, %s109
      %p113 = scmp.eq.s32.totalorder %s10, 0
      %p114 = por %p112, %p113
      %p115 = scmp.ne.s32.totalorder %s107, %s109
      %p116 = scmp.eq.s32.totalorder %s15, 1
      %p117 = por %p115, %p116
      %p118 = scmp.ne.s32.totalorder %s109, %s110
      %p119 = scmp.eq.s32.totalorder %s15, 0
      %p120 = por %p118, %p119
      %p121 = scmp.ne.s32.totalorder %s109, %s110
      %p122 = scmp.eq.s32.totalorder %s16, 1
      %p123 = por %p121, %p122
      %p125 = scmp.ne.s32.totalorder %s110, %s124
      %p126 = scmp.eq.s32.totalorder %s16, 0
      %p127 = por %p125, %p126
      %p128 = scmp.le.s32.totalorder 1, %s10
      %p129 = scmp.lt.s32.totalorder %s10, 3
      %p130 = pnand %p128, %p129
      %p131 = pneg %p130
      // Predicated region
      $region9: #{tpu_custom_call.1} parent=5 // pred_check
        _
      $region10: #{tpu_custom_call.1} parent=5 // pred_check_branch
        %133 = sbr.rel (%p130) target = $region12
      $region11: #{tpu_custom_call.1} parent=5 // pred_region
        %s134 = ssub.s32 %s10, 1
        // Predicated region
        $region13: #{tpu_custom_call.1} parent=11 // pred_check
          %p135 = pneg %p99
        $region14: #{tpu_custom_call.1} parent=11 // pred_check_branch
          %137 = sbr.rel (%p135) target = $region16
        $region15: #{tpu_custom_call.1} parent=11 // pred_region
          _
        $region16: #{tpu_custom_call.1} parent=11 // pred_fallthru
          _
      $region12: #{tpu_custom_call.1} parent=5 // pred_fallthru
        _
      %p138 = scmp.lt.s32.totalorder %s10, 2
      // Predicated region
      $region17: #{tpu_custom_call.1} parent=5 // pred_check
        %p139 = pneg %p138
      $region18: #{tpu_custom_call.1} parent=5 // pred_check_branch
        %141 = sbr.rel (%p139) target = $region20
      $region19: #{tpu_custom_call.1} parent=5 // pred_region
        // Predicated region
        $region21: #{tpu_custom_call.1} parent=19 // pred_check
          %p142 = pneg %p44
        $region22: #{tpu_custom_call.1} parent=19 // pred_check_branch
          %144 = sbr.rel (%p142) target = $region24
        $region23: #{tpu_custom_call.1} parent=19 // pred_region
          %s145 = smul.u32 2, %s18
          %p146 = scmp.lt.s32.totalorder %s17, 1
          %s147 = scalar_select %p146, %s17, 1
          %p148 = scmp.lt.s32.totalorder %s145, 1
          %s149 = scalar_select %p148, %s145, 1
          %s150 = smul.addr %s147, 4
          %s151 = sadd.s32 %s149, %s150
          %s152 = smul.addr %s151, 8
          %s153 = scalar_lea.vmem %s0, %s152
          %s154 = smul.u32 2, %s18
        $region24: #{tpu_custom_call.1} parent=19 // pred_fallthru
          _
        // Predicated region
        $region25: #{tpu_custom_call.1} parent=19 // pred_check
          %p155 = pneg %p72
        $region26: #{tpu_custom_call.1} parent=19 // pred_check_branch
          %157 = sbr.rel (%p155) target = $region28
        $region27: #{tpu_custom_call.1} parent=19 // pred_region
          %s158 = smul.u32 2, %s18
          %p159 = scmp.lt.s32.totalorder %s17, 1
          %s160 = scalar_select %p159, %s17, 1
          %p161 = scmp.lt.s32.totalorder %s158, 1
          %s162 = scalar_select %p161, %s158, 1
          %s163 = smul.addr %s160, 2
          %s164 = sadd.s32 %s162, %s163
          %s165 = scalar_lea.vmem %s1, %s164
          %s166 = smul.u32 2, %s18
        $region28: #{tpu_custom_call.1} parent=19 // pred_fallthru
          _
      $region20: #{tpu_custom_call.1} parent=5 // pred_fallthru
        _
      %p167 = scmp.le.s32.totalorder 1, %s10
      %p168 = scmp.lt.s32.totalorder %s10, 3
      %p169 = pnand %p167, %p168
      %p170 = pneg %p169
      // Predicated region
      $region29: #{tpu_custom_call.1} parent=5 // pred_check
        _
      $region30: #{tpu_custom_call.1} parent=5 // pred_check_branch
        %172 = sbr.rel (%p169) target = $region32
      $region31: #{tpu_custom_call.1} parent=5 // pred_region
        %s173 = ssub.s32 %s10, 1
        %s174 = smul.u32 2, %s20
        %p175 = scmp.lt.s32.totalorder %s19, 1
        %s176 = scalar_select %p175, %s19, 1
        %p177 = scmp.lt.s32.totalorder %s174, 1
        %s178 = scalar_select %p177, %s174, 1
        %s179 = smul.addr %s176, 4
        %s180 = sadd.s32 %s178, %s179
        %s181 = smul.addr %s180, 8
        %s182 = scalar_lea.vmem %s0, %s181
        %p183 = pneg %p50
        %p184 = pneg %p47
        %s185 = smul.u32 2, %s20
        %p186 = scmp.lt.s32.totalorder %s19, 1
        %s187 = scalar_select %p186, %s19, 1
        %p188 = scmp.lt.s32.totalorder %s185, 1
        %s189 = scalar_select %p188, %s185, 1
        %s190 = smul.addr %s187, 2
        %s191 = sadd.s32 %s189, %s190
        %s192 = scalar_lea.vmem %s1, %s191
        %p193 = pneg %p78
        %p194 = pneg %p75
        %p195 = pneg %p99
        %p196 = pneg %p96
        %p197 = pneg %p120
        %p198 = pneg %p117
        %s199 = smul.u32 2, %s20
        %p200 = scmp.lt.s32.totalorder %s19, 1
        %s201 = scalar_select %p200, %s19, 1
        %p202 = scmp.lt.s32.totalorder %s199, 1
        %s203 = scalar_select %p202, %s199, 1
        %s204 = smul.addr %s201, 4
        %s205 = sadd.s32 %s203, %s204
        %s206 = smul.addr %s205, 8
        %s207 = scalar_lea.vmem %s0, %s206
        %s208 = smul.u32 2, %s20
        %s209 = smul.u32 2, %s20
        %p210 = scmp.lt.s32.totalorder %s19, 1
        %s211 = scalar_select %p210, %s19, 1
        %p212 = scmp.lt.s32.totalorder %s209, 1
        %s213 = scalar_select %p212, %s209, 1
        %s214 = smul.addr %s211, 2
        %s215 = sadd.s32 %s213, %s214
        %s216 = scalar_lea.vmem %s1, %s215
        %s217 = smul.u32 2, %s20
        %p218 = scmp.eq.s32.totalorder %s19, 0
        %p219 = scmp.eq.s32.totalorder %s20, 0
        %p220 = pnand %p218, %p219
        %p221 = pneg %p220
        // Predicated region
        $region33: #{tpu_custom_call.1} parent=31 // pred_check
          _
        $region34: #{tpu_custom_call.1} parent=31 // pred_check_branch
          %223 = sbr.rel (%p220) target = $region36
        $region35: #{tpu_custom_call.1} parent=31 // pred_region
          %224 = vst [vmem:[#allocation2] sm:$0xff] 0.0
          %225 = vst [vmem:[#allocation2 + $0x8] sm:$0xff] 0.0
          %226 = vst [vmem:[#allocation2 + $0x10] sm:$0x1] 0.0
          %227 = vst [vmem:[#allocation2 + $0x18] sm:$0x1] 0.0
          %228 = vst [vmem:[#allocation3] sm:$0xff] 0.0
          %229 = vst [vmem:[#allocation3 + $0x8] sm:$0xff] 0.0
          %230 = vst [vmem:[#allocation3 + $0x10] sm:$0x1] 0.0
          %231 = vst [vmem:[#allocation3 + $0x18] sm:$0x1] 0.0
          %v232 = vlaneseq
          %vm233 = vcmp.ge.s32.totalorder %v232, 0
          %vm234 = vcmp.lt.s32.totalorder %v232, 256
          %vm235 = vmand %vm233, %vm234
          %236 = vst.msk [vmem:[#allocation4] sm:$0x3] %vm235, 0.0
        $region36: #{tpu_custom_call.1} parent=31 // pred_fallthru
          _
        %v237 = vld [vmem:[%s207] sm:$0xff]
        %v238 = vld [vmem:[%s207 + $0x8] sm:$0xff]
        %v239 = vld [vmem:[%s207 + $0x10] sm:$0x1]
        %v240 = vld [vmem:[%s207 + $0x18] sm:$0x1]
        %v241 = vld [vmem:[%s216] sm:$0x3]
        %vm242 = vcmp.gt.s32.totalorder %v241, 0
        %v243 = vsel %vm242, 1, 0
        %v244 = vcvt.s32.f32 %v243
        %v245 = vlaneseq
        %v246 = vshrl.u32 %v245, 7
        %v247 = vadd.s32 %v246, 8
        %v248 = vlaneseq
        %v249 = vshrl.u32 %v248, 7
        %v250 = vsub.s32 0, %v249
        %v251 = vrot.slane %v241, %v250
        %v252 = vlaneseq
        %v253 = vshrl.u32 %v252, 7
        %v254 = vsub.s32 1, %v253
        %v255 = vrot.slane %v241, %v254
        %vm256 = vcmp.eq.s32.totalorder %v251, %v246
        %vm257 = vcmp.eq.s32.totalorder %v255, %v246
        %vm258 = vcmp.eq.s32.totalorder %v251, %v247
        %vm259 = vcmp.eq.s32.totalorder %v255, %v247
        %v260 = vsel %vm256, 1, 0
        %v261 = vsel %vm257, 1, 0
        %v262 = vsel %vm258, 1, 0
        %v263 = vsel %vm259, 1, 0
        %v264 = vcvt.s32.f32 %v260
        %v265 = vcvt.s32.f32 %v261
        %v266 = vcvt.s32.f32 %v262
        %v267 = vcvt.s32.f32 %v263
        %vm268 = vcmp.le.f32.partialorder %v264, 0.0
        %vm269 = vcmp.le.f32.partialorder %v265, 0.0
        %vm270 = vcmp.le.f32.partialorder %v266, 0.0
        %vm271 = vcmp.le.f32.partialorder %v267, 0.0
        %v272 = vsel %vm268, 1.0, %v264
        %v273 = vsel %vm269, 1.0, %v265
        %v274 = vsel %vm270, 1.0, %v266
        %v275 = vsel %vm271, 1.0, %v267
        %vm276 = vcmp.gt.f32.partialorder %v272, 0.0
        %vm277 = vcmp.gt.f32.partialorder %v273, 0.0
        %vm278 = vcmp.gt.f32.partialorder %v274, 0.0
        %vm279 = vcmp.gt.f32.partialorder %v275, 0.0
        %v280 = vsel %vm276, 0.0, %v272
        %v281 = vsel %vm277, 0.0, %v273
        %v282 = vsel %vm278, 0.0, %v274
        %v283 = vsel %vm279, 0.0, %v275
        %v285 = vlaneseq
        %v286 = vshrl.u32 %v285, 7
        %v287 = vsub.s32 0, %v286
        %v288 = vrot.slane %v244, %v287
        %v289 = vlaneseq
        %v290 = vshrl.u32 %v289, 7
        %v291 = vsub.s32 1, %v290
        %v292 = vrot.slane %v244, %v291
        %v295 = vmul.f32 %v280, %v288
        %v296 = vmul.f32 %v281, %v292
        %v297 = vmul.f32 %v282, %v288
        %v298 = vmul.f32 %v283, %v292
        %vm299 = vcmp.ge.f32.partialorder %v295, 1.0
        %vm300 = vcmp.ge.f32.partialorder %v296, 1.0
        %vm301 = vcmp.ge.f32.partialorder %v297, 1.0
        %vm302 = vcmp.ge.f32.partialorder %v298, 1.0
        %v303 = vsel %vm299, 1.0, 0.0
        %v304 = vsel %vm300, 1.0, 0.0
        %v305 = vsel %vm301, 1.0, 0.0
        %v306 = vsel %vm302, 1.0, 0.0
        %v307 = vmul.f32 %v237, %v303
        %v308 = vmul.f32 %v238, %v304
        %v309 = vmul.f32 %v239, %v305
        %v310 = vmul.f32 %v240, %v306
        %v311 = vld [vmem:[#allocation2] sm:$0xff]
        %v312 = vld [vmem:[#allocation2 + $0x8] sm:$0xff]
        %v313 = vld [vmem:[#allocation2 + $0x10] sm:$0x1]
        %v314 = vld [vmem:[#allocation2 + $0x18] sm:$0x1]
        %v315 = vmul.f32 %v307, %v288
        %v316 = vmul.f32 %v308, %v292
        %v317 = vmul.f32 %v309, %v288
        %v318 = vmul.f32 %v310, %v292
        %v319 = vadd.f32 %v311, %v315
        %v320 = vadd.f32 %v312, %v316
        %v321 = vadd.f32 %v313, %v317
        %v322 = vadd.f32 %v314, %v318
        %323 = vst [vmem:[#allocation2] sm:$0xff] %v319
        %324 = vst [vmem:[#allocation2 + $0x8] sm:$0xff] %v320
        %325 = vst [vmem:[#allocation2 + $0x10] sm:$0x1] %v321
        %326 = vst [vmem:[#allocation2 + $0x18] sm:$0x1] %v322
        %v327 = vld [vmem:[#allocation3] sm:$0xff]
        %v328 = vld [vmem:[#allocation3 + $0x8] sm:$0xff]
        %v329 = vld [vmem:[#allocation3 + $0x10] sm:$0x1]
        %v330 = vld [vmem:[#allocation3 + $0x18] sm:$0x1]
        %v331 = vmul.f32 %v307, %v307
        %v332 = vmul.f32 %v308, %v308
        %v333 = vmul.f32 %v309, %v309
        %v334 = vmul.f32 %v310, %v310
        %v335 = vadd.f32 %v327, %v331
        %v336 = vadd.f32 %v328, %v332
        %v337 = vadd.f32 %v329, %v333
        %v338 = vadd.f32 %v330, %v334
        %339 = vst [vmem:[#allocation3] sm:$0xff] %v335
        %340 = vst [vmem:[#allocation3 + $0x8] sm:$0xff] %v336
        %341 = vst [vmem:[#allocation3 + $0x10] sm:$0x1] %v337
        %342 = vst [vmem:[#allocation3 + $0x18] sm:$0x1] %v338
        %v343 = vld [vmem:[#allocation4] sm:$0x3]
        %v344 = vadd.f32 %v343, %v244
        %v345 = vlaneseq
        %vm346 = vcmp.ge.s32.totalorder %v345, 0
        %vm347 = vcmp.lt.s32.totalorder %v345, 256
        %vm348 = vmand %vm346, %vm347
        %349 = vst.msk [vmem:[#allocation4] sm:$0x3] %vm348, %v344
        %p350 = scmp.eq.s32.totalorder %s19, 1
        %p351 = pnand %p350, %p219
        %p352 = pneg %p351
        // Predicated region
        $region37: #{tpu_custom_call.1} parent=31 // pred_check
          _
        $region38: #{tpu_custom_call.1} parent=31 // pred_check_branch
          %354 = sbr.rel (%p351) target = $region40
        $region39: #{tpu_custom_call.1} parent=31 // pred_region
          %v355 = vld [vmem:[#allocation2] sm:$0xff]
          %v356 = vld [vmem:[#allocation2 + $0x8] sm:$0xff]
          %v357 = vld [vmem:[#allocation2 + $0x10] sm:$0x1]
          %v358 = vld [vmem:[#allocation2 + $0x18] sm:$0x1]
          %v359 = vadd.f32 %v355, %v356
          %360 = vadd.xlane.f32.xlu0 %v359
          %v361 = vpop.xlane.xlu0 %360
          %vm362 = vcmask 1040384
          %v363 = vsel %vm362, %v357, 0.0
          %v364 = vsel %vm362, %v358, 0.0
          %v365 = vadd.f32 %v363, %v364
          %366 = vadd.xlane.f32.xlu0 %v365
          %v367 = vpop.xlane.xlu0 %366
          %v368 = vld [vmem:[#allocation3] sm:$0xff]
          %v369 = vld [vmem:[#allocation3 + $0x8] sm:$0xff]
          %v370 = vld [vmem:[#allocation3 + $0x10] sm:$0x1]
          %v371 = vld [vmem:[#allocation3 + $0x18] sm:$0x1]
          %v372 = vadd.f32 %v368, %v369
          %373 = vadd.xlane.f32.xlu0 %v372
          %v374 = vpop.xlane.xlu0 %373
          %v375 = vsel %vm362, %v370, 0.0
          %v376 = vsel %vm362, %v371, 0.0
          %v377 = vadd.f32 %v375, %v376
          %378 = vadd.xlane.f32.xlu0 %v377
          %v379 = vpop.xlane.xlu0 %378
          %v380 = vld [vmem:[#allocation4] sm:$0x3]
          %v382 = vlaneseq
          %v383 = vshrl.u32 %v382, 7
          %v384 = vsub.s32 0, %v383
          %v385 = vrot.slane %v380, %v384
          %v386 = vlaneseq
          %v387 = vshrl.u32 %v386, 7
          %v388 = vsub.s32 1, %v387
          %v389 = vrot.slane %v380, %v388
          %v392 = vsel %vm362, %v385, 0.0
          %v393 = vsel %vm362, %v389, 0.0
          %v394 = vadd.f32 %v392, %v393
          %395 = vadd.xlane.f32.xlu0 %v394
          %v396 = vpop.xlane.xlu0 %395
          %v397 = vrot.slane %v396, 4
          %v398 = vadd.f32 %v396, %v397
          %v399 = vrot.slane %v398, 2
          %v400 = vadd.f32 %v398, %v399
          %v401 = vrot.slane %v400, 1
          %v402 = vadd.f32 %v400, %v401
          %s403 = vtos %v402
          %v404 = vstv %s403
          %v405 = vadd.f32 %v361, %v404
          %v406 = vadd.f32 %v367, %v404
          %v407 = vmul.f32 %v361, 2.0
          %v408 = vmul.f32 %v367, 2.0
          %v409 = vadd.f32 %v374, %v407
          %v410 = vadd.f32 %v379, %v408
          %v411 = vadd.f32 %v409, %v404
          %v412 = vadd.f32 %v410, %v404
          %v413 = vmul.f32 %v405, 2.0
          %v414 = vmul.f32 %v406, 2.0
          %v415 = vadd.f32 %v413, 1e-05
          %v416 = vadd.f32 %v414, 1e-05
          %v417 = vadd.f32 %v411, %v404
          %v418 = vadd.f32 %v412, %v404
          %v419 = vadd.f32 %v417, 1e-05
          %v420 = vadd.f32 %v418, 1e-05
          %v421 = vrcp.pop %v419
          %v422 = vmul.f32 %v415, %v421
          %v423 = vrcp.pop %v420
          %v424 = vmul.f32 %v416, %v423
          %v425 = vsub.f32 1.0, %v422
          %v426 = vsub.f32 1.0, %v424
          %v427 = vld [vmem:[%s2] sm:$0xff]
          %v428 = vld [vmem:[%s2 + $0x8] sm:$0x1]
          %v429 = vmul.f32 %v425, %v427
          %v430 = vmul.f32 %v426, %v428
          %vm431 = vcmask 7168
          %v432 = vsel %vm431, %v429, 0.0
          %vm433 = vcmask 0
          %v434 = vsel %vm433, %v430, 0.0
          %v435 = vadd.f32 %v432, %v434
          %436 = vadd.xlane.f32.xlu0 %v435
          %v437 = vpop.xlane.xlu0 %436
          %v438 = vrot.slane %v437, 4
          %v439 = vadd.f32 %v437, %v438
          %v440 = vrot.slane %v439, 2
          %v441 = vadd.f32 %v439, %v440
          %v442 = vrot.slane %v441, 1
          %v443 = vadd.f32 %v441, %v442
          %s444 = vtos %v443
          %v445 = vrcp.pop 9.0
          %s446 = vtos %v445
          %s447 = smul.f32 %s444, %s446
          %v448 = vstv %s447
          %449 = vst [vmem:[#allocation5] sm:$0x1] %v448
        $region40: #{tpu_custom_call.1} parent=31 // pred_fallthru
          _
        // Predicated region
        $region41: #{tpu_custom_call.1} parent=31 // pred_check
          %p450 = pneg %p117
        $region42: #{tpu_custom_call.1} parent=31 // pred_check_branch
          %452 = sbr.rel (%p450) target = $region44
        $region43: #{tpu_custom_call.1} parent=31 // pred_region
          %s454 = ssub.s32 16, 16
          %455 = vsyncadd [#allocation6], %s454
          %s457 = sshll.u32 [#allocation5], 4
          %s458 = int_to_ptr.vmem [resolvable:$true] %s457
          %460 = dma.vmem_to_hbm [thread:$0]  %s458, 16, %s3, [#allocation6]
        $region44: #{tpu_custom_call.1} parent=31 // pred_fallthru
          _
        // Predicated region
        $region45: #{tpu_custom_call.1} parent=31 // pred_check
          %p461 = pneg %p117
        $region46: #{tpu_custom_call.1} parent=31 // pred_check_branch
          %463 = sbr.rel (%p461) target = $region48
        $region47: #{tpu_custom_call.1} parent=31 // pred_region
          %464 = dma.done [#allocation6], 16
        $region48: #{tpu_custom_call.1} parent=31 // pred_fallthru
          _
      $region32: #{tpu_custom_call.1} parent=5 // pred_fallthru
        _
      %p465 = scmp.le.s32.totalorder 2, %s10
      // Predicated region
      $region49: #{tpu_custom_call.1} parent=5 // pred_check
        %p466 = pneg %p465
      $region50: #{tpu_custom_call.1} parent=5 // pred_check_branch
        %468 = sbr.rel (%p466) target = $region52
      $region51: #{tpu_custom_call.1} parent=5 // pred_region
        %s469 = ssub.s32 %s10, 2
      $region52: #{tpu_custom_call.1} parent=5 // pred_fallthru
        _
    $region6: #{tpu_custom_call.1} parent=1 // loop_footer
      %s14 = sadd.s32 1, %s10
    $region7: #{tpu_custom_call.1} parent=1 // loop_footer_branch
      %9 = sbr.rel target = $region3
    $region8: #{tpu_custom_call.1} parent=1 // loop_exit
      _
    %470 = vsyncpa [#allocation6], 1
    %s471 = scalar_lea.sflag [#allocation6], 1
    %472 = vsyncpa %s471, 1

</llo_original>
